<compile_context>
chip_gen: v7x
topology: tpu7x:2x2x1
jax: 0.10.0
libtpu: 0.0.40
codegen_flags: <defaults>
</compile_context>

<pallas_src>
import functools

import numpy as np
import jax
import jax.numpy as jnp
from jax import lax
from jax.experimental import pallas as pl
from jax.experimental.pallas import tpu as pltpu

# ----------------------- Mask2FormerConfig defaults ------------------------
CLASS_WEIGHT = 2.0      # config.class_weight
MASK_WEIGHT = 5.0       # config.mask_weight
DICE_WEIGHT = 5.0       # config.dice_weight
NO_OBJECT_WEIGHT = 0.1  # config.no_object_weight (eos_coef)

WEIGHT_DICT = {
    "loss_cross_entropy": CLASS_WEIGHT,
    "loss_mask": MASK_WEIGHT,
    "loss_dice": DICE_WEIGHT,
}

_LANE = 128


def _round_up(x, m):
    return ((x + m - 1) // m) * m


def _choose_pixel_tile(p, max_tile=2048):
    """Largest 128-multiple tile <= max_tile that divides P (else full P)."""
    if p <= max_tile:
        return p
    for cand in (2048, 1024, 512, 256, 128):
        if cand <= max_tile and p % cand == 0:
            return cand
    return p


# ================= Kernel 1: matcher cost (P-tiled, accumulated) ===========
def _cost_kernel(mask_ref, tgt_ref, tgt_sum_ref, cls_ref, onehot_ref,
                 cost_ref, acc_ce, acc_dice, acc_sp, acc_prob, *, inv_p):
    k = pl.program_id(2)

    @pl.when(k == 0)
    def _init():
        acc_ce[...] = jnp.zeros_like(acc_ce)
        acc_dice[...] = jnp.zeros_like(acc_dice)
        acc_sp[...] = jnp.zeros_like(acc_sp)
        acc_prob[...] = jnp.zeros_like(acc_prob)

    x = mask_ref[0, 0]                     # [Q, Pk]    f32
    tgt = tgt_ref[0]                       # [T_pad, Pk] bf16 (0/1)

    # Single EUP exp pass shared by softplus(-x) and sigmoid(x).
    t = jnp.exp(-jnp.abs(x))
    sp_neg = jnp.maximum(-x, 0.0) + jnp.log1p(t)              # softplus(-x)
    inv_1pt = pl.reciprocal(1.0 + t, approx=True)
    probs = jnp.where(x >= 0.0, inv_1pt, t * inv_1pt)          # sigmoid(x)

    contract = (((1,), (1,)), ((), ()))                        # A @ B.T
    ntgt = jnp.ones_like(tgt) - tgt                            # (1 - target), bf16
    # BCE fusion: softplus(x) = x + softplus(-x)  =>
    #   loss_pos + loss_neg = rowsum(softplus(-x))/P + (x @ (1-tgt)^T)/P
    acc_ce[...] += lax.dot_general(x.astype(jnp.bfloat16), ntgt, contract,
                                   preferred_element_type=jnp.float32)
    acc_dice[...] += lax.dot_general(probs.astype(jnp.bfloat16), tgt, contract,
                                     preferred_element_type=jnp.float32)
    acc_sp[...] += jnp.sum(sp_neg, axis=-1, keepdims=True)      # [Q, 1]
    acc_prob[...] += jnp.sum(probs, axis=-1, keepdims=True)     # [Q, 1]

    @pl.when(k == pl.num_programs(2) - 1)
    def _finalize():
        cost_mask = (acc_sp[...] + acc_ce[...]) * inv_p                 # [Q, T_pad]
        denom = acc_prob[...] + tgt_sum_ref[0]                          # [Q,1]+[1,T_pad]
        cost_dice = 1.0 - (2.0 * acc_dice[...] + 1.0) / (denom + 1.0)
        cls_probs = jax.nn.softmax(cls_ref[0, 0], axis=-1)              # [Q, K]
        cost_class = -lax.dot_general(cls_probs, onehot_ref[0], contract,
                                      preferred_element_type=jnp.float32)
        cost = (MASK_WEIGHT * cost_mask + CLASS_WEIGHT * cost_class
                + DICE_WEIGHT * cost_dice)
        cost = jnp.clip(cost, -1e10, 1e10)
        cost = jnp.where(jnp.isnan(cost), 0.0, cost)
        cost_ref[0, 0] = cost


def compute_cost_matrices(mask_logits, targets, tgt_sums, cls_logits,
                          cls_onehot):
    """mask_logits [L,B,Q,P] f32, targets [B,T_pad,P] bf16,
    tgt_sums [B,1,T_pad] f32, cls_logits [L,B,Q,K], cls_onehot [B,T_pad,K].
    Returns cost [L,B,Q,T_pad] (columns >= T are padding)."""
    L, B, Q, P = mask_logits.shape
    T_pad = targets.shape[1]
    K = cls_logits.shape[-1]
    pk = _choose_pixel_tile(P)
    nk = P // pk
    kernel = functools.partial(_cost_kernel, inv_p=1.0 / P)
    return pl.pallas_call(
        kernel,
        out_shape=jax.ShapeDtypeStruct((L, B, Q, T_pad), jnp.float32),
        grid=(L, B, nk),
        in_specs=[
            pl.BlockSpec((1, 1, Q, pk), lambda l, b, k: (l, b, 0, k)),
            pl.BlockSpec((1, T_pad, pk), lambda l, b, k: (b, 0, k)),
            pl.BlockSpec((1, 1, T_pad), lambda l, b, k: (b, 0, 0)),
            pl.BlockSpec((1, 1, Q, K), lambda l, b, k: (l, b, 0, 0)),
            pl.BlockSpec((1, T_pad, K), lambda l, b, k: (b, 0, 0)),
        ],
        out_specs=pl.BlockSpec((1, 1, Q, T_pad), lambda l, b, k: (l, b, 0, 0)),
        scratch_shapes=[
            pltpu.VMEM((Q, T_pad), jnp.float32),   # acc_ce
            pltpu.VMEM((Q, T_pad), jnp.float32),   # acc_dice numerator
            pltpu.VMEM((Q, 1), jnp.float32),       # acc softplus(-x) row sums
            pltpu.VMEM((Q, 1), jnp.float32),       # acc sigmoid(x) row sums
        ],
        compiler_params=pltpu.CompilerParams(
            dimension_semantics=("parallel", "parallel", "arbitrary")),
    )(mask_logits, targets, tgt_sums, cls_logits, cls_onehot)


# ========= Kernel 2: matched-pair BCE + dice with in-kernel gather =========
def _pair_loss_kernel(src_idx_ref, tgt_idx_ref, pred_ref, lab_ref,
                      bce_ref, dice_ref, *, inv_p):
    del src_idx_ref, tgt_idx_ref      # only used by the index_maps
    x = pred_ref[0]                               # [1, P] f32
    z = lab_ref[0].astype(jnp.float32)            # [1, P]

    t = jnp.exp(-jnp.abs(x))
    # BCEWithLogits: max(x,0) - x*z + log1p(exp(-|x|))
    bce = jnp.maximum(x, 0.0) - x * z + jnp.log1p(t)
    bce_mean = jnp.sum(bce) * inv_p

    # sigmoid(x) reusing exp(-|x|); reciprocal on the EUP slot.
    inv_1pt = pl.reciprocal(1.0 + t, approx=True)
    probs = jnp.where(x >= 0.0, inv_1pt, t * inv_1pt)
    numerator = 2.0 * jnp.sum(probs * z)
    denominator = jnp.sum(probs) + jnp.sum(z)
    dice = 1.0 - (numerator + 1.0) / (denominator + 1.0)

    bce_ref[...] = jnp.broadcast_to(bce_mean, (1, 1, 1))
    dice_ref[...] = jnp.broadcast_to(dice, (1, 1, 1))


def pair_mask_dice_losses(pred_rows, label_rows, src_idx, tgt_idx):
    """pred_rows [L*B*Q, 1, P] f32, label_rows [B*T_pad, 1, P] bf16,
    src_idx/tgt_idx int32 [N] row indices. Returns per-pair (bce_mean, dice)."""
    N = int(src_idx.shape[0])
    P = pred_rows.shape[-1]
    kernel = functools.partial(_pair_loss_kernel, inv_p=1.0 / P)
    grid_spec = pltpu.PrefetchScalarGridSpec(
        num_scalar_prefetch=2,
        grid=(N,),
        in_specs=[
            pl.BlockSpec((1, 1, P), lambda n, src, tgt: (src[n], 0, 0)),
            pl.BlockSpec((1, 1, P), lambda n, src, tgt: (tgt[n], 0, 0)),
        ],
        out_specs=[
            pl.BlockSpec((1, 1, 1), lambda n, src, tgt: (n, 0, 0)),
            pl.BlockSpec((1, 1, 1), lambda n, src, tgt: (n, 0, 0)),
        ],
    )
    bce, dice = pl.pallas_call(
        kernel,
        out_shape=(jax.ShapeDtypeStruct((N, 1, 1), jnp.float32),
                   jax.ShapeDtypeStruct((N, 1, 1), jnp.float32)),
        grid_spec=grid_spec,
        compiler_params=pltpu.CompilerParams(
            dimension_semantics=("parallel",)),
    )(src_idx, tgt_idx, pred_rows, label_rows)
    return bce.reshape(N), dice.reshape(N)


# ========== Kernel 3: weighted classification CE (all levels) ==============
def _ce_kernel(logits_ref, onehot_ref, weight_ref, loss_ref):
    x = logits_ref[0]        # [R, K]
    oh = onehot_ref[0]       # [R, K]
    w = weight_ref[...]      # [1, K]

    m = jnp.max(x, axis=-1, keepdims=True)
    lse = m + jnp.log(jnp.sum(jnp.exp(x - m), axis=-1, keepdims=True))
    log_probs = x - lse
    per_loss = -jnp.sum(oh * log_probs, axis=-1, keepdims=True)   # [R, 1]
    per_weight = jnp.sum(oh * w, axis=-1, keepdims=True)          # [R, 1]
    loss = jnp.sum(per_weight * per_loss) / jnp.sum(per_weight)
    loss_ref[...] = jnp.broadcast_to(loss, (1, 1, 1))


def classification_losses(logits, target_onehot, weight):
    """logits [L, R, K], target_onehot [L, R, K], weight [1, K] -> [L]."""
    L, R, K = logits.shape
    out = pl.pallas_call(
        _ce_kernel,
        out_shape=jax.ShapeDtypeStruct((L, 1, 1), jnp.float32),
        grid=(L,),
        in_specs=[
            pl.BlockSpec((1, R, K), lambda l: (l, 0, 0)),
            pl.BlockSpec((1, R, K), lambda l: (l, 0, 0)),
            pl.BlockSpec((1, K), lambda l: (0, 0)),
        ],
        out_specs=pl.BlockSpec((1, 1, 1), lambda l: (l, 0, 0)),
        compiler_params=pltpu.CompilerParams(
            dimension_semantics=("parallel",)),
    )(logits, target_onehot, weight)
    return out.reshape(L)


# ======================= host-side Hungarian matching ======================
def _linear_sum_assignment(cost):
    """O(n^2 m) Hungarian (shortest augmenting path), host numpy.
    Returns (row_ind, col_ind) for a rectangular cost matrix, like scipy."""
    # TODO(synk): no clean Pallas equivalent for sequential augmenting paths.
    cost = np.asarray(cost, dtype=np.float64)
    transposed = cost.shape[0] > cost.shape[1]
    if transposed:
        cost = cost.T
    n, m = cost.shape
    u = np.zeros(n + 1)
    v = np.zeros(m + 1)
    match = np.zeros(m + 1, dtype=np.int64)   # column -> row (1-based), 0=free
    way = np.zeros(m + 1, dtype=np.int64)
    for i in range(1, n + 1):
        match[0] = i
        j0 = 0
        minv = np.full(m + 1, np.inf)
        used = np.zeros(m + 1, dtype=bool)
        while True:
            used[j0] = True
            i0 = match[j0]
            delta = np.inf
            j1 = 0
            for j in range(1, m + 1):
                if not used[j]:
                    cur = cost[i0 - 1, j - 1] - u[i0] - v[j]
                    if cur < minv[j]:
                        minv[j] = cur
                        way[j] = j0
                    if minv[j] < delta:
                        delta = minv[j]
                        j1 = j
            for j in range(m + 1):
                if used[j]:
                    u[match[j]] += delta
                    v[j] -= delta
                else:
                    minv[j] -= delta
            j0 = j1
            if match[j0] == 0:
                break
        while j0 != 0:
            j1 = way[j0]
            match[j0] = match[j1]
            j0 = j1
    rows, cols = [], []
    for j in range(1, m + 1):
        if match[j] != 0:
            rows.append(match[j] - 1)
            cols.append(j - 1)
    rows = np.asarray(rows, dtype=np.int32)
    cols = np.asarray(cols, dtype=np.int32)
    if transposed:
        rows, cols = cols, rows
    order = np.argsort(rows)
    return rows[order], cols[order]


# ============================ Mask2Former losses ===========================
def _mask2former_losses_all_levels(pred_masks_list, pred_logits_list,
                                   mask_labels, class_labels):
    """Main + all auxiliary levels: one cost pallas_call, one host sync."""
    L = len(pred_masks_list)
    B, Q, H, W = pred_masks_list[0].shape
    P = H * W
    T = mask_labels.shape[1]
    K = pred_logits_list[0].shape[-1]        # num_labels + 1
    num_labels = K - 1
    T_pad = max(_round_up(T, _LANE), _LANE)  # lane-dense cost output

    # Stack levels into single HBM slabs (consumed by kernels 1 and 2).
    masks_all = jnp.stack([m.reshape(B, Q, P) for m in pred_masks_list]
                          ).astype(jnp.float32)                   # [L,B,Q,P]
    cls_all = jnp.stack(pred_logits_list).astype(jnp.float32)     # [L,B,Q,K]

    # Targets: bf16 (0/1 exact) for MXU operands + halved HBM traffic.
    targets_pad = jnp.pad(mask_labels.reshape(B, T, P).astype(jnp.bfloat16),
                          ((0, 0), (0, T_pad - T), (0, 0)))       # [B,T_pad,P]
    # Per-target pixel counts precomputed in f32 (avoids in-kernel relayout).
    tgt_sums = jnp.sum(targets_pad.astype(jnp.float32),
                       axis=-1)[:, None, :]                       # [B,1,T_pad]

    cls_onehot = jax.nn.one_hot(class_labels, K, dtype=jnp.float32)
    cls_onehot_pad = jnp.pad(cls_onehot, ((0, 0), (0, T_pad - T), (0, 0)))

    # ---- Kernel 1: matcher costs for every level ---------------------------
    # TODO(synk): HF matcher samples `num_points` random coordinates via
    # grid_sample; here all H*W pixels are used as the point set.
    cost = compute_cost_matrices(masks_all, targets_pad, tgt_sums,
                                 cls_all, cls_onehot_pad)         # [L,B,Q,T_pad]

    # ---- Host: Hungarian assignment (single device->host sync) ------------
    cost_np = np.asarray(jax.device_get(cost))
    class_labels_np = np.asarray(jax.device_get(class_labels))

    src_idx = np.zeros((L, B, T), dtype=np.int32)   # rows into [L*B*Q, P]
    tgt_idx = np.zeros((L, B, T), dtype=np.int32)   # rows into [B*T_pad, P]
    target_classes = np.full((L, B, Q), num_labels, dtype=np.int32)
    for lvl in range(L):
        for b in range(B):
            rows, cols = _linear_sum_assignment(cost_np[lvl, b, :, :T])
            src_idx[lvl, b] = (lvl * B + b) * Q + rows
            tgt_idx[lvl, b] = b * T_pad + cols
            target_classes[lvl, b, rows] = class_labels_np[b, cols]

    # ---- Kernel 2: matched mask / dice losses (rows gathered in-kernel) ---
    # TODO(synk): HF samples 12544 points with uncertainty-based importance
    # sampling; here the full H*W pixel grid is used instead.
    bce_rows, dice_rows = pair_mask_dice_losses(
        masks_all.reshape(L * B * Q, 1, P),
        targets_pad.reshape(B * T_pad, 1, P),
        jnp.asarray(src_idx.reshape(-1)),
        jnp.asarray(tgt_idx.reshape(-1)))

    num_masks = max(float(B * T), 1.0)
    loss_mask_lv = jnp.sum(bce_rows.reshape(L, B * T), axis=1) / num_masks
    loss_dice_lv = jnp.sum(dice_rows.reshape(L, B * T), axis=1) / num_masks

    # ---- Kernel 3: weighted classification CE for every level -------------
    target_onehot = jax.nn.one_hot(jnp.asarray(target_classes), K,
                                   dtype=jnp.float32).reshape(L, B * Q, K)
    empty_weight = jnp.ones((1, K), jnp.float32).at[0, num_labels].set(
        NO_OBJECT_WEIGHT)
    loss_ce_lv = classification_losses(cls_all.reshape(L, B * Q, K),
                                       target_onehot, empty_weight)

    loss_dict = {
        "loss_cross_entropy": loss_ce_lv[0],
        "loss_mask": loss_mask_lv[0],
        "loss_dice": loss_dice_lv[0],
    }
    for lvl in range(1, L):
        idx = lvl - 1
        loss_dict[f"loss_cross_entropy_{idx}"] = loss_ce_lv[lvl]
        loss_dict[f"loss_mask_{idx}"] = loss_mask_lv[lvl]
        loss_dict[f"loss_dice_{idx}"] = loss_dice_lv[lvl]
    return loss_dict


# =========================== SS2Mask2FormerLoss ============================
def ss2_mask2former_loss(masks_queries_logits, class_queries_logits,
                         mask_labels, class_labels, auxiliary_predictions):
    pred_masks = [masks_queries_logits]
    pred_logits = [class_queries_logits]
    if auxiliary_predictions is not None:
        for aux in auxiliary_predictions:
            pred_masks.append(aux["masks_queries_logits"])
            pred_logits.append(aux["class_queries_logits"])

    loss_dict = _mask2former_losses_all_levels(pred_masks, pred_logits,
                                               mask_labels, class_labels)

    # `loss *= weight` for every weight_dict key contained in the loss key,
    # then sum everything (mirrors the PyTorch in-place weighting + sum()).
    total = jnp.float32(0.0)
    for loss_key, loss in loss_dict.items():
        for key, weight in WEIGHT_DICT.items():
            if key in loss_key:
                loss = loss * weight
        total = total + loss
    return total


# ================================== main ===================================
if __name__ == "__main__":
    B, Q, H, W = 2, 8, 16, 16
    NUM_LABELS = 4              # classes; logits have NUM_LABELS + 1 columns
    T = 3                       # fixed number of target masks per image

    key = jax.random.PRNGKey(0)
    k1, k2, k3, k4, k5, k6 = jax.random.split(key, 6)

    masks_queries_logits = jax.random.normal(k1, (B, Q, H, W), jnp.float32)
    class_queries_logits = jax.random.normal(k2, (B, Q, NUM_LABELS + 1),
                                             jnp.float32)
    mask_labels = (jax.random.uniform(k3, (B, T, H, W)) > 0.5).astype(
        jnp.float32)
    class_labels = jax.random.randint(k4, (B, T), 0, NUM_LABELS, jnp.int32)

    auxiliary_predictions = (
        {"masks_queries_logits": jax.random.normal(k5, (B, Q, H, W),
                                                   jnp.float32),
         "class_queries_logits": jax.random.normal(k6, (B, Q, NUM_LABELS + 1),
                                                   jnp.float32)},
    )

    total_loss = ss2_mask2former_loss(masks_queries_logits,
                                      class_queries_logits,
                                      mask_labels, class_labels,
                                      auxiliary_predictions)
    total_loss = jax.block_until_ready(total_loss)
    assert np.isfinite(float(total_loss))
    print("KERNEL_OK")
</pallas_src>

<mosaic_0001>
module attributes {stable_mosaic.version = 11 : i64} {
  func.func @_cost_kernel(%arg0: i32, %arg1: i32, %arg2: i32, %arg3: memref<1x1x8x256xf32, #tpu.memory_space<vmem>>, %arg4: memref<1x128x256xbf16, #tpu.memory_space<vmem>>, %arg5: memref<1x1x128xf32, #tpu.memory_space<vmem>>, %arg6: memref<1x1x8x5xf32, #tpu.memory_space<vmem>>, %arg7: memref<1x128x5xf32, #tpu.memory_space<vmem>>, %arg8: memref<1x1x8x128xf32, #tpu.memory_space<vmem>>, %arg9: memref<8x128xf32, #tpu.memory_space<vmem>>, %arg10: memref<8x128xf32, #tpu.memory_space<vmem>>, %arg11: memref<8x1xf32, #tpu.memory_space<vmem>>, %arg12: memref<8x1xf32, #tpu.memory_space<vmem>>) attributes {dimension_semantics = [#tpu.dimension_semantics<parallel>, #tpu.dimension_semantics<parallel>, #tpu.dimension_semantics<arbitrary>], iteration_bounds = array<i64: 2, 2, 1>, scalar_prefetch = 0 : i64, scratch_operands = 4 : i64, tpu.core_type = #tpu.core_type<tc>, window_params = [{transform_indices = @transform_0, window_bounds = array<i64: 1, 1, 8, 256>}, {transform_indices = @transform_1, window_bounds = array<i64: 1, 128, 256>}, {transform_indices = @transform_2, window_bounds = array<i64: 1, 1, 128>}, {transform_indices = @transform_3, window_bounds = array<i64: 1, 1, 8, 5>}, {transform_indices = @transform_4, window_bounds = array<i64: 1, 128, 5>}, {transform_indices = @transform_5, window_bounds = array<i64: 1, 1, 8, 128>}]} {
    %c0_i32 = arith.constant 0 : i32
    %0 = arith.cmpi eq, %arg2, %c0_i32 : i32
    %1 = arith.extui %0 : i1 to i32
    %c0_i32_0 = arith.constant 0 : i32
    %2 = arith.cmpi ne, %1, %c0_i32_0 : i32
    scf.if %2 {
      %cst_34 = arith.constant 0.000000e+00 : f32
      %49 = vector.broadcast %cst_34 : f32 to vector<8x128xf32>
      %c0_35 = arith.constant 0 : index
      %c0_36 = arith.constant 0 : index
      %50 = vector.load %arg9[%c0_35, %c0_36] : memref<8x128xf32, #tpu.memory_space<vmem>>, vector<8x128xf32>
      tpu.vector_store %arg9[%c0_35, %c0_36], %49 {strides = array<i32>} : memref<8x128xf32, #tpu.memory_space<vmem>>, vector<8x128xf32>,
      %cst_37 = arith.constant 0.000000e+00 : f32
      %51 = vector.broadcast %cst_37 : f32 to vector<8x128xf32>
      %c0_38 = arith.constant 0 : index
      %c0_39 = arith.constant 0 : index
      %52 = vector.load %arg10[%c0_38, %c0_39] : memref<8x128xf32, #tpu.memory_space<vmem>>, vector<8x128xf32>
      tpu.vector_store %arg10[%c0_38, %c0_39], %51 {strides = array<i32>} : memref<8x128xf32, #tpu.memory_space<vmem>>, vector<8x128xf32>,
      %cst_40 = arith.constant 0.000000e+00 : f32
      %53 = vector.broadcast %cst_40 : f32 to vector<8x1xf32>
      %c0_41 = arith.constant 0 : index
      %c0_42 = arith.constant 0 : index
      %54 = vector.load %arg11[%c0_41, %c0_42] : memref<8x1xf32, #tpu.memory_space<vmem>>, vector<8x1xf32>
      tpu.vector_store %arg11[%c0_41, %c0_42], %53 {strides = array<i32>} : memref<8x1xf32, #tpu.memory_space<vmem>>, vector<8x1xf32>,
      %cst_43 = arith.constant 0.000000e+00 : f32
      %55 = vector.broadcast %cst_43 : f32 to vector<8x1xf32>
      %c0_44 = arith.constant 0 : index
      %c0_45 = arith.constant 0 : index
      %56 = vector.load %arg12[%c0_44, %c0_45] : memref<8x1xf32, #tpu.memory_space<vmem>>, vector<8x1xf32>
      tpu.vector_store %arg12[%c0_44, %c0_45], %55 {strides = array<i32>} : memref<8x1xf32, #tpu.memory_space<vmem>>, vector<8x1xf32>,
    } else {
    }
    %c0 = arith.constant 0 : index
    %c0_1 = arith.constant 0 : index
    %c0_2 = arith.constant 0 : index
    %c0_3 = arith.constant 0 : index
    %3 = vector.load %arg3[%c0, %c0_1, %c0_2, %c0_3] : memref<1x1x8x256xf32, #tpu.memory_space<vmem>>, vector<1x1x8x256xf32>
    %4 = vector.shape_cast %3 : vector<1x1x8x256xf32> to vector<8x256xf32>
    %c0_4 = arith.constant 0 : index
    %c0_5 = arith.constant 0 : index
    %c0_6 = arith.constant 0 : index
    %5 = vector.load %arg4[%c0_4, %c0_5, %c0_6] : memref<1x128x256xbf16, #tpu.memory_space<vmem>>, vector<1x128x256xbf16>
    %6 = vector.shape_cast %5 : vector<1x128x256xbf16> to vector<128x256xbf16>
    %7 = math.absf %4 : vector<8x256xf32>
    %cst = arith.constant 0.000000e+00 : f32
    %8 = vector.broadcast %cst : f32 to vector<8x256xf32>
    %9 = arith.subf %8, %7 : vector<8x256xf32>
    %10 = math.exp %9 : vector<8x256xf32>
    %cst_7 = arith.constant 0.000000e+00 : f32
    %11 = vector.broadcast %cst_7 : f32 to vector<8x256xf32>
    %12 = arith.subf %11, %4 : vector<8x256xf32>
    %cst_8 = arith.constant 0.000000e+00 : f32
    %13 = vector.broadcast %cst_8 : f32 to vector<8x256xf32>
    %14 = arith.maximumf %12, %13 : vector<8x256xf32>
    %15 = math.log1p %10 : vector<8x256xf32>
    %16 = arith.addf %14, %15 : vector<8x256xf32>
    %cst_9 = arith.constant 1.000000e+00 : f32
    %17 = vector.broadcast %cst_9 : f32 to vector<8x256xf32>
    %18 = arith.addf %17, %10 : vector<8x256xf32>
    %19 = tpu.reciprocal %18 {approx = true} : vector<8x256xf32> -> vector<8x256xf32>
    %cst_10 = arith.constant 0.000000e+00 : f32
    %20 = vector.broadcast %cst_10 : f32 to vector<8x256xf32>
    %21 = arith.cmpf oge, %4, %20 : vector<8x256xf32>
    %22 = arith.mulf %10, %19 : vector<8x256xf32>
    %23 = arith.select %21, %19, %22 : vector<8x256xi1>, vector<8x256xf32>
    %cst_11 = arith.constant 1.000000e+00 : bf16
    %24 = vector.broadcast %cst_11 : bf16 to vector<128x256xbf16>
    %25 = arith.subf %24, %6 : vector<128x256xbf16>
    %c0_12 = arith.constant 0 : index
    %c0_13 = arith.constant 0 : index
    %26 = vector.load %arg9[%c0_12, %c0_13] : memref<8x128xf32, #tpu.memory_space<vmem>>, vector<8x128xf32>
    %27 = arith.truncf %4 : vector<8x256xf32> to vector<8x256xbf16>
    %cst_14 = arith.constant dense<0.000000e+00> : vector<8x128xf32>
    %28 = tpu.matmul %27, %25, %cst_14 {dimension_numbers = #tpu.dot_dimension_numbers<[1], [1], [0], [0], [0, 0, 1, 0], [], []>} : vector<8x256xbf16>, vector<128x256xbf16>, vector<8x128xf32> -> vector<8x128xf32>
    %29 = arith.addf %26, %28 : vector<8x128xf32>
    %c0_15 = arith.constant 0 : index
    %c0_16 = arith.constant 0 : index
    %30 = vector.load %arg9[%c0_15, %c0_16] : memref<8x128xf32, #tpu.memory_space<vmem>>, vector<8x128xf32>
    tpu.vector_store %arg9[%c0_15, %c0_16], %29 {strides = array<i32>} : memref<8x128xf32, #tpu.memory_space<vmem>>, vector<8x128xf32>,
    %c0_17 = arith.constant 0 : index
    %c0_18 = arith.constant 0 : index
    %31 = vector.load %arg10[%c0_17, %c0_18] : memref<8x128xf32, #tpu.memory_space<vmem>>, vector<8x128xf32>
    %32 = arith.truncf %23 : vector<8x256xf32> to vector<8x256xbf16>
    %cst_19 = arith.constant dense<0.000000e+00> : vector<8x128xf32>
    %33 = tpu.matmul %32, %6, %cst_19 {dimension_numbers = #tpu.dot_dimension_numbers<[1], [1], [0], [0], [0, 0, 1, 0], [], []>} : vector<8x256xbf16>, vector<128x256xbf16>, vector<8x128xf32> -> vector<8x128xf32>
    %34 = arith.addf %31, %33 : vector<8x128xf32>
    %c0_20 = arith.constant 0 : index
    %c0_21 = arith.constant 0 : index
    %35 = vector.load %arg10[%c0_20, %c0_21] : memref<8x128xf32, #tpu.memory_space<vmem>>, vector<8x128xf32>
    tpu.vector_store %arg10[%c0_20, %c0_21], %34 {strides = array<i32>} : memref<8x128xf32, #tpu.memory_space<vmem>>, vector<8x128xf32>,
    %c0_22 = arith.constant 0 : index
    %c0_23 = arith.constant 0 : index
    %36 = vector.load %arg11[%c0_22, %c0_23] : memref<8x1xf32, #tpu.memory_space<vmem>>, vector<8x1xf32>
    %cst_24 = arith.constant dense<0.000000e+00> : vector<8xf32>
    %37 = vector.multi_reduction <add>, %16, %cst_24 [1] : vector<8x256xf32> to vector<8xf32>
    %38 = vector.shape_cast %37 : vector<8xf32> to vector<8x1xf32>
    %39 = arith.addf %36, %38 : vector<8x1xf32>
    %c0_25 = arith.constant 0 : index
    %c0_26 = arith.constant 0 : index
    %40 = vector.load %arg11[%c0_25, %c0_26] : memref<8x1xf32, #tpu.memory_space<vmem>>, vector<8x1xf32>
    tpu.vector_store %arg11[%c0_25, %c0_26], %39 {strides = array<i32>} : memref<8x1xf32, #tpu.memory_space<vmem>>, vector<8x1xf32>,
    %c0_27 = arith.constant 0 : index
    %c0_28 = arith.constant 0 : index
    %41 = vector.load %arg12[%c0_27, %c0_28] : memref<8x1xf32, #tpu.memory_space<vmem>>, vector<8x1xf32>
    %cst_29 = arith.constant dense<0.000000e+00> : vector<8xf32>
    %42 = vector.multi_reduction <add>, %23, %cst_29 [1] : vector<8x256xf32> to vector<8xf32>
    %43 = vector.shape_cast %42 : vector<8xf32> to vector<8x1xf32>
    %44 = arith.addf %41, %43 : vector<8x1xf32>
    %c0_30 = arith.constant 0 : index
    %c0_31 = arith.constant 0 : index
    %45 = vector.load %arg12[%c0_30, %c0_31] : memref<8x1xf32, #tpu.memory_space<vmem>>, vector<8x1xf32>
    tpu.vector_store %arg12[%c0_30, %c0_31], %44 {strides = array<i32>} : memref<8x1xf32, #tpu.memory_space<vmem>>, vector<8x1xf32>,
    %c0_i32_32 = arith.constant 0 : i32
    %46 = arith.cmpi eq, %arg2, %c0_i32_32 : i32
    %47 = arith.extui %46 : i1 to i32
    %c0_i32_33 = arith.constant 0 : i32
    %48 = arith.cmpi ne, %47, %c0_i32_33 : i32
    scf.if %48 {
      %c0_34 = arith.constant 0 : index
      %c0_35 = arith.constant 0 : index
      %49 = vector.load %arg11[%c0_34, %c0_35] : memref<8x1xf32, #tpu.memory_space<vmem>>, vector<8x1xf32>
      %c0_36 = arith.constant 0 : index
      %c0_37 = arith.constant 0 : index
      %50 = vector.load %arg9[%c0_36, %c0_37] : memref<8x128xf32, #tpu.memory_space<vmem>>, vector<8x128xf32>
      %51 = vector.broadcast %49 : vector<8x1xf32> to vector<8x128xf32>
      %52 = arith.addf %51, %50 : vector<8x128xf32>
      %cst_38 = arith.constant 3.906250e-03 : f32
      %53 = vector.broadcast %cst_38 : f32 to vector<8x128xf32>
      %54 = arith.mulf %52, %53 : vector<8x128xf32>
      %c0_39 = arith.constant 0 : index
      %c0_40 = arith.constant 0 : index
      %55 = vector.load %arg12[%c0_39, %c0_40] : memref<8x1xf32, #tpu.memory_space<vmem>>, vector<8x1xf32>
      %c0_41 = arith.constant 0 : index
      %c0_42 = arith.constant 0 : index
      %c0_43 = arith.constant 0 : index
      %56 = vector.load %arg5[%c0_41, %c0_42, %c0_43] : memref<1x1x128xf32, #tpu.memory_space<vmem>>, vector<1x1x128xf32>
      %57 = vector.shape_cast %56 : vector<1x1x128xf32> to vector<1x128xf32>
      %58 = vector.broadcast %55 : vector<8x1xf32> to vector<8x128xf32>
      %59 = vector.broadcast %57 : vector<1x128xf32> to vector<8x128xf32>
      %60 = arith.addf %58, %59 : vector<8x128xf32>
      %c0_44 = arith.constant 0 : index
      %c0_45 = arith.constant 0 : index
      %61 = vector.load %arg10[%c0_44, %c0_45] : memref<8x128xf32, #tpu.memory_space<vmem>>, vector<8x128xf32>
      %cst_46 = arith.constant 2.000000e+00 : f32
      %62 = vector.broadcast %cst_46 : f32 to vector<8x128xf32>
      %63 = arith.mulf %62, %61 : vector<8x128xf32>
      %cst_47 = arith.constant 1.000000e+00 : f32
      %64 = vector.broadcast %cst_47 : f32 to vector<8x128xf32>
      %65 = arith.addf %63, %64 : vector<8x128xf32>
      %cst_48 = arith.constant 1.000000e+00 : f32
      %66 = vector.broadcast %cst_48 : f32 to vector<8x128xf32>
      %67 = arith.addf %60, %66 : vector<8x128xf32>
      %68 = arith.divf %65, %67 : vector<8x128xf32>
      %cst_49 = arith.constant 1.000000e+00 : f32
      %69 = vector.broadcast %cst_49 : f32 to vector<8x128xf32>
      %70 = arith.subf %69, %68 : vector<8x128xf32>
      %c0_50 = arith.constant 0 : index
      %c0_51 = arith.constant 0 : index
      %c0_52 = arith.constant 0 : index
      %c0_53 = arith.constant 0 : index
      %71 = vector.load %arg6[%c0_50, %c0_51, %c0_52, %c0_53] : memref<1x1x8x5xf32, #tpu.memory_space<vmem>>, vector<1x1x8x5xf32>
      %72 = vector.shape_cast %71 : vector<1x1x8x5xf32> to vector<8x5xf32>
      %cst_54 = arith.constant dense<0xFF800000> : vector<8xf32>
      %73 = vector.multi_reduction <maximumf>, %72, %cst_54 [1] : vector<8x5xf32> to vector<8xf32>
      %cst_55 = arith.constant 0xFF800000 : f32
      %74 = vector.broadcast %cst_55 : f32 to vector<8xf32>
      %75 = arith.maximumf %74, %73 : vector<8xf32>
      %76 = vector.shape_cast %75 : vector<8xf32> to vector<8x1xf32>
      %77 = vector.broadcast %76 : vector<8x1xf32> to vector<8x5xf32>
      %78 = arith.subf %72, %77 : vector<8x5xf32>
      %79 = math.exp %78 : vector<8x5xf32>
      %cst_56 = arith.constant dense<0.000000e+00> : vector<8xf32>
      %80 = vector.multi_reduction <add>, %79, %cst_56 [1] : vector<8x5xf32> to vector<8xf32>
      %81 = vector.shape_cast %80 : vector<8xf32> to vector<8x1xf32>
      %82 = vector.broadcast %81 : vector<8x1xf32> to vector<8x5xf32>
      %83 = arith.divf %79, %82 : vector<8x5xf32>
      %c0_57 = arith.constant 0 : index
      %c0_58 = arith.constant 0 : index
      %c0_59 = arith.constant 0 : index
      %84 = vector.load %arg7[%c0_57, %c0_58, %c0_59] : memref<1x128x5xf32, #tpu.memory_space<vmem>>, vector<1x128x5xf32>
      %85 = vector.shape_cast %84 : vector<1x128x5xf32> to vector<128x5xf32>
      %cst_60 = arith.constant dense<0.000000e+00> : vector<8x128xf32>
      %86 = tpu.matmul %83, %85, %cst_60 {dimension_numbers = #tpu.dot_dimension_numbers<[1], [1], [0], [0], [0, 0, 1, 0], [], []>} : vector<8x5xf32>, vector<128x5xf32>, vector<8x128xf32> -> vector<8x128xf32>
      %cst_61 = arith.constant 0.000000e+00 : f32
      %87 = vector.broadcast %cst_61 : f32 to vector<8x128xf32>
      %88 = arith.subf %87, %86 : vector<8x128xf32>
      %cst_62 = arith.constant 5.000000e+00 : f32
      %89 = vector.broadcast %cst_62 : f32 to vector<8x128xf32>
      %90 = arith.mulf %89, %54 : vector<8x128xf32>
      %cst_63 = arith.constant 2.000000e+00 : f32
      %91 = vector.broadcast %cst_63 : f32 to vector<8x128xf32>
      %92 = arith.mulf %91, %88 : vector<8x128xf32>
      %93 = arith.addf %90, %92 : vector<8x128xf32>
      %cst_64 = arith.constant 5.000000e+00 : f32
      %94 = vector.broadcast %cst_64 : f32 to vector<8x128xf32>
      %95 = arith.mulf %94, %70 : vector<8x128xf32>
      %96 = arith.addf %93, %95 : vector<8x128xf32>
      %cst_65 = arith.constant -1.000000e+10 : f32
      %cst_66 = arith.constant 1.000000e+10 : f32
      %97 = vector.broadcast %cst_65 : f32 to vector<8x128xf32>
      %98 = arith.maximumf %97, %96 : vector<8x128xf32>
      %99 = vector.broadcast %cst_66 : f32 to vector<8x128xf32>
      %100 = arith.minimumf %99, %98 : vector<8x128xf32>
      %101 = arith.cmpf one, %100, %100 : vector<8x128xf32>
      %cst_67 = arith.constant 0.000000e+00 : f32
      %102 = vector.broadcast %cst_67 : f32 to vector<8x128xf32>
      %103 = arith.select %101, %102, %100 : vector<8x128xi1>, vector<8x128xf32>
      %c0_68 = arith.constant 0 : index
      %c0_69 = arith.constant 0 : index
      %c0_70 = arith.constant 0 : index
      %c0_71 = arith.constant 0 : index
      %104 = vector.load %arg8[%c0_68, %c0_69, %c0_70, %c0_71] : memref<1x1x8x128xf32, #tpu.memory_space<vmem>>, vector<1x1x8x128xf32>
      %105 = vector.shape_cast %104 : vector<1x1x8x128xf32> to vector<8x128xf32>
      %106 = vector.shape_cast %103 : vector<8x128xf32> to vector<1x1x8x128xf32>
      tpu.vector_store %arg8[%c0_68, %c0_69, %c0_70, %c0_71], %106 {strides = array<i32>} : memref<1x1x8x128xf32, #tpu.memory_space<vmem>>, vector<1x1x8x128xf32>,
    } else {
    }
    return
  }
  func.func @transform_0(%arg0: i32, %arg1: i32, %arg2: i32) -> (i32, i32, i32, i32) {
    %c0_i32 = arith.constant 0 : i32
    %c0_i32_0 = arith.constant 0 : i32
    return %arg0, %arg1, %c0_i32, %arg2 : i32, i32, i32, i32
  }
  func.func @transform_1(%arg0: i32, %arg1: i32, %arg2: i32) -> (i32, i32, i32) {
    %c0_i32 = arith.constant 0 : i32
    %c0_i32_0 = arith.constant 0 : i32
    return %arg1, %c0_i32, %arg2 : i32, i32, i32
  }
  func.func @transform_2(%arg0: i32, %arg1: i32, %arg2: i32) -> (i32, i32, i32) {
    %c0_i32 = arith.constant 0 : i32
    %c0_i32_0 = arith.constant 0 : i32
    %c0_i32_1 = arith.constant 0 : i32
    return %arg1, %c0_i32, %c0_i32_0 : i32, i32, i32
  }
  func.func @transform_3(%arg0: i32, %arg1: i32, %arg2: i32) -> (i32, i32, i32, i32) {
    %c0_i32 = arith.constant 0 : i32
    %c0_i32_0 = arith.constant 0 : i32
    %c0_i32_1 = arith.constant 0 : i32
    return %arg0, %arg1, %c0_i32, %c0_i32_0 : i32, i32, i32, i32
  }
  func.func @transform_4(%arg0: i32, %arg1: i32, %arg2: i32) -> (i32, i32, i32) {
    %c0_i32 = arith.constant 0 : i32
    %c0_i32_0 = arith.constant 0 : i32
    %c0_i32_1 = arith.constant 0 : i32
    return %arg1, %c0_i32, %c0_i32_0 : i32, i32, i32
  }
  func.func @transform_5(%arg0: i32, %arg1: i32, %arg2: i32) -> (i32, i32, i32, i32) {
    %c0_i32 = arith.constant 0 : i32
    %c0_i32_0 = arith.constant 0 : i32
    %c0_i32_1 = arith.constant 0 : i32
    return %arg0, %arg1, %c0_i32, %c0_i32_0 : i32, i32, i32, i32
  }
}

</mosaic_0001>

<llo_original>
// kernel: tpu_custom_call.1
$region0: #{tpu_custom_call.1}
  #allocation0 [shape = 'u32[]', space=smem, size = 0x4, offset = 0x4, fixed_abs, tag = 'smem constant byte address 0x4 - core index']
  #allocation1 [shape = 'u32[144,128]{1,0:T(1,128)}', space=vmem, size = 0x12000, scoped, tag = 'internal scratch']
  #allocation2 [shape = 'f32[8,128]{1,0:T(8,128)}', space=vmem, size = 0x1000, scoped, tag = 'scratch operand']
  #allocation3 [shape = 'f32[8,128]{1,0:T(8,128)}', space=vmem, size = 0x1000, scoped, tag = 'scratch operand']
  #allocation4 [shape = 'f32[8,1]{1,0:T(8,128)}', space=vmem, size = 0x1000, scoped, tag = 'scratch operand']
  #allocation5 [shape = 'f32[8,1]{1,0:T(8,128)}', space=vmem, size = 0x1000, scoped, tag = 'scratch operand']
  %s0 = inlined_call_operand.vmem [shape: f32[2,2,8,256], index: 0, kind: input, shape index: {}]
  %s1 = inlined_call_operand.vmem [shape: bf16[2,128,256], index: 1, kind: input, shape index: {}]
  %s2 = inlined_call_operand.vmem [shape: f32[2,1,128], index: 2, kind: input, shape index: {}]
  %s3 = inlined_call_operand.vmem [shape: f32[2,2,8,5], index: 3, kind: input, shape index: {}]
  %s4 = inlined_call_operand.vmem [shape: f32[2,128,5], index: 4, kind: input, shape index: {}]
  %s5 = inlined_call_operand.hbm [shape: f32[2,2,8,128], index: 5, kind: output, shape index: {}]
  %s6 = sld [smem:[#allocation0]]
  $region61: #{tpu_custom_call.1} parent=0
    _
  %s8 = ssub.s32 1, %s6
  %s9 = scalar_select 0, %s8, %s6
  $region1: #{tpu_custom_call.1} parent=0
    #allocation6 [shape = 'u8[8192]{0}', space=vmem, size = 0x2000, scoped, tag = 'output window, operand 0']
    #allocation7 [shape = 's32[2]{0}', space=sflag, size = 0x8, scoped, tag = 'scoped memory for tpu_custom_call.1']
    %10 = vsyncpa [#allocation7], 0
    %s11 = scalar_lea.sflag [#allocation7], 1
    %12 = vsyncpa %s11, 0
    loop: start=0, step=1, limit=6
    $region2: #{tpu_custom_call.1} parent=1 // loop_pre_header
      _
    $region3: #{tpu_custom_call.1} parent=1 // loop_header
      %s14 = sphi 0, %s18
      %p15 = scmp.ge.s32.totalorder %s14, 6
      %s21 = sphi 0, %s40
      %s22 = sphi 0, %s36
      %s23 = sphi 0, %s32
      %s24 = sphi 0, %s21
      %s25 = sphi 0, %s22
      %s26 = sphi 0, %s23
      %s27 = sphi 0, %s24
      %s28 = sphi 0, %s25
      %s29 = sphi 0, %s26
      %s47 = sphi 0, %s49
      %s50 = sphi 0, %s47
      %s51 = sphi 0, %s50
      %s67 = sphi 0, %s51
      %s75 = sphi 0, %s77
      %s78 = sphi 0, %s75
      %s79 = sphi 0, %s78
      %s95 = sphi 0, %s79
      %s101 = sphi 0, %s103
      %s104 = sphi 0, %s101
      %s105 = sphi 0, %s104
      %s121 = sphi 0, %s105
      %s129 = sphi 0, %s131
      %s132 = sphi 0, %s129
      %s133 = sphi 0, %s132
      %s149 = sphi 0, %s133
      %s155 = sphi 0, %s157
      %s158 = sphi 0, %s155
      %s159 = sphi 0, %s158
      %s175 = sphi 0, %s159
      %s183 = sphi 0, %s185
      %s186 = sphi 0, %s183
      %s187 = sphi 0, %s186
      %s203 = sphi 0, %s187
    $region4: #{tpu_custom_call.1} parent=1 // loop_header_branch
      %17 = sbr.rel (%p15) target = $region8
    $region5: #{tpu_custom_call.1} parent=1 // loop_body
      %s19 = ssub.s32 %s14, 1
      %s20 = ssub.s32 %s14, 2
      %s30 = sadd.s32 1, %s23
      %p31 = scmp.ge.s32.totalorder %s30, 1
      %s32 = scalar_select %p31, 0, %s30
      %s33 = sadd.s32 1, %s22
      %s34 = scalar_select %p31, %s33, %s22
      %p35 = scmp.ge.s32.totalorder %s34, 2
      %s36 = scalar_select %p35, 0, %s34
      %s37 = sadd.s32 1, %s21
      %s38 = scalar_select %p35, %s37, %s21
      %p39 = scmp.ge.s32.totalorder %s38, 2
      %s40 = scalar_select %p39, 0, %s38
      %s41 = ssub.s32 %s21, %s40
      %s42 = ssub.s32 %s22, %s36
      %s43 = sor.u32 %s41, %s42
      %s44 = ssub.s32 %s23, %s32
      %s45 = sor.u32 %s43, %s44
      %p46 = scmp.eq.s32.totalorder %s45, 0
      %s48 = sadd.s32 %s47, 1
      %s49 = scalar_select %p46, %s47, %s48
      %p52 = pneg %p46
      %p53 = scmp.eq.s32.totalorder %s14, 3
      %p54 = por %p52, %p53
      %p55 = scmp.ne.s32.totalorder %s47, %s50
      %p56 = scmp.eq.s32.totalorder %s14, 0
      %p57 = por %p55, %p56
      %p58 = scmp.ne.s32.totalorder %s47, %s50
      %p59 = scmp.eq.s32.totalorder %s19, 3
      %p60 = por %p58, %p59
      %p61 = scmp.ne.s32.totalorder %s50, %s51
      %p62 = scmp.eq.s32.totalorder %s19, 0
      %p63 = por %p61, %p62
      %p64 = scmp.ne.s32.totalorder %s50, %s51
      %p65 = scmp.eq.s32.totalorder %s20, 3
      %p66 = por %p64, %p65
      %p68 = scmp.ne.s32.totalorder %s51, %s67
      %p69 = scmp.eq.s32.totalorder %s20, 0
      %p70 = por %p68, %p69
      %s71 = ssub.s32 %s22, %s36
      %s72 = ssub.s32 %s23, %s32
      %s73 = sor.u32 %s71, %s72
      %p74 = scmp.eq.s32.totalorder %s73, 0
      %s76 = sadd.s32 %s75, 1
      %s77 = scalar_select %p74, %s75, %s76
      %p80 = pneg %p74
      %p81 = scmp.eq.s32.totalorder %s14, 3
      %p82 = por %p80, %p81
      %p83 = scmp.ne.s32.totalorder %s75, %s78
      %p84 = scmp.eq.s32.totalorder %s14, 0
      %p85 = por %p83, %p84
      %p86 = scmp.ne.s32.totalorder %s75, %s78
      %p87 = scmp.eq.s32.totalorder %s19, 3
      %p88 = por %p86, %p87
      %p89 = scmp.ne.s32.totalorder %s78, %s79
      %p90 = scmp.eq.s32.totalorder %s19, 0
      %p91 = por %p89, %p90
      %p92 = scmp.ne.s32.totalorder %s78, %s79
      %p93 = scmp.eq.s32.totalorder %s20, 3
      %p94 = por %p92, %p93
      %p96 = scmp.ne.s32.totalorder %s79, %s95
      %p97 = scmp.eq.s32.totalorder %s20, 0
      %p98 = por %p96, %p97
      %s99 = ssub.s32 %s22, %s36
      %p100 = scmp.eq.s32.totalorder %s99, 0
      %s102 = sadd.s32 %s101, 1
      %s103 = scalar_select %p100, %s101, %s102
      %p106 = pneg %p100
      %p107 = scmp.eq.s32.totalorder %s14, 3
      %p108 = por %p106, %p107
      %p109 = scmp.ne.s32.totalorder %s101, %s104
      %p110 = scmp.eq.s32.totalorder %s14, 0
      %p111 = por %p109, %p110
      %p112 = scmp.ne.s32.totalorder %s101, %s104
      %p113 = scmp.eq.s32.totalorder %s19, 3
      %p114 = por %p112, %p113
      %p115 = scmp.ne.s32.totalorder %s104, %s105
      %p116 = scmp.eq.s32.totalorder %s19, 0
      %p117 = por %p115, %p116
      %p118 = scmp.ne.s32.totalorder %s104, %s105
      %p119 = scmp.eq.s32.totalorder %s20, 3
      %p120 = por %p118, %p119
      %p122 = scmp.ne.s32.totalorder %s105, %s121
      %p123 = scmp.eq.s32.totalorder %s20, 0
      %p124 = por %p122, %p123
      %s125 = ssub.s32 %s21, %s40
      %s126 = ssub.s32 %s22, %s36
      %s127 = sor.u32 %s125, %s126
      %p128 = scmp.eq.s32.totalorder %s127, 0
      %s130 = sadd.s32 %s129, 1
      %s131 = scalar_select %p128, %s129, %s130
      %p134 = pneg %p128
      %p135 = scmp.eq.s32.totalorder %s14, 3
      %p136 = por %p134, %p135
      %p137 = scmp.ne.s32.totalorder %s129, %s132
      %p138 = scmp.eq.s32.totalorder %s14, 0
      %p139 = por %p137, %p138
      %p140 = scmp.ne.s32.totalorder %s129, %s132
      %p141 = scmp.eq.s32.totalorder %s19, 3
      %p142 = por %p140, %p141
      %p143 = scmp.ne.s32.totalorder %s132, %s133
      %p144 = scmp.eq.s32.totalorder %s19, 0
      %p145 = por %p143, %p144
      %p146 = scmp.ne.s32.totalorder %s132, %s133
      %p147 = scmp.eq.s32.totalorder %s20, 3
      %p148 = por %p146, %p147
      %p150 = scmp.ne.s32.totalorder %s133, %s149
      %p151 = scmp.eq.s32.totalorder %s20, 0
      %p152 = por %p150, %p151
      %s153 = ssub.s32 %s22, %s36
      %p154 = scmp.eq.s32.totalorder %s153, 0
      %s156 = sadd.s32 %s155, 1
      %s157 = scalar_select %p154, %s155, %s156
      %p160 = pneg %p154
      %p161 = scmp.eq.s32.totalorder %s14, 3
      %p162 = por %p160, %p161
      %p163 = scmp.ne.s32.totalorder %s155, %s158
      %p164 = scmp.eq.s32.totalorder %s14, 0
      %p165 = por %p163, %p164
      %p166 = scmp.ne.s32.totalorder %s155, %s158
      %p167 = scmp.eq.s32.totalorder %s19, 3
      %p168 = por %p166, %p167
      %p169 = scmp.ne.s32.totalorder %s158, %s159
      %p170 = scmp.eq.s32.totalorder %s19, 0
      %p171 = por %p169, %p170
      %p172 = scmp.ne.s32.totalorder %s158, %s159
      %p173 = scmp.eq.s32.totalorder %s20, 3
      %p174 = por %p172, %p173
      %p176 = scmp.ne.s32.totalorder %s159, %s175
      %p177 = scmp.eq.s32.totalorder %s20, 0
      %p178 = por %p176, %p177
      %s179 = ssub.s32 %s21, %s40
      %s180 = ssub.s32 %s22, %s36
      %s181 = sor.u32 %s179, %s180
      %p182 = scmp.eq.s32.totalorder %s181, 0
      %s184 = sadd.s32 %s183, 1
      %s185 = scalar_select %p182, %s183, %s184
      %p188 = pneg %p182
      %p189 = scmp.eq.s32.totalorder %s14, 3
      %p190 = por %p188, %p189
      %p191 = scmp.ne.s32.totalorder %s183, %s186
      %p192 = scmp.eq.s32.totalorder %s14, 0
      %p193 = por %p191, %p192
      %p194 = scmp.ne.s32.totalorder %s183, %s186
      %p195 = scmp.eq.s32.totalorder %s19, 3
      %p196 = por %p194, %p195
      %p197 = scmp.ne.s32.totalorder %s186, %s187
      %p198 = scmp.eq.s32.totalorder %s19, 0
      %p199 = por %p197, %p198
      %p200 = scmp.ne.s32.totalorder %s186, %s187
      %p201 = scmp.eq.s32.totalorder %s20, 3
      %p202 = por %p200, %p201
      %p204 = scmp.ne.s32.totalorder %s187, %s203
      %p205 = scmp.eq.s32.totalorder %s20, 0
      %p206 = por %p204, %p205
      %p207 = scmp.le.s32.totalorder 1, %s14
      %p208 = scmp.lt.s32.totalorder %s14, 5
      %p209 = pnand %p207, %p208
      %p210 = pneg %p209
      // Predicated region
      $region9: #{tpu_custom_call.1} parent=5 // pred_check
        _
      $region10: #{tpu_custom_call.1} parent=5 // pred_check_branch
        %212 = sbr.rel (%p209) target = $region12
      $region11: #{tpu_custom_call.1} parent=5 // pred_region
        %s213 = ssub.s32 %s14, 1
      $region12: #{tpu_custom_call.1} parent=5 // pred_fallthru
        _
      %p214 = scmp.lt.s32.totalorder %s14, 4
      // Predicated region
      $region13: #{tpu_custom_call.1} parent=5 // pred_check
        %p215 = pneg %p214
      $region14: #{tpu_custom_call.1} parent=5 // pred_check_branch
        %217 = sbr.rel (%p215) target = $region16
      $region15: #{tpu_custom_call.1} parent=5 // pred_region
        // Predicated region
        $region17: #{tpu_custom_call.1} parent=15 // pred_check
          %p218 = pneg %p57
        $region18: #{tpu_custom_call.1} parent=15 // pred_check_branch
          %220 = sbr.rel (%p218) target = $region20
        $region19: #{tpu_custom_call.1} parent=15 // pred_region
          %s221 = smul.u32 2, %s23
          %p222 = scmp.lt.s32.totalorder %s21, 1
          %s223 = scalar_select %p222, %s21, 1
          %p224 = scmp.lt.s32.totalorder %s22, 1
          %s225 = scalar_select %p224, %s22, 1
          %p226 = scmp.lt.s32.totalorder %s221, 1
          %s227 = scalar_select %p226, %s221, 1
          %s228 = smul.addr %s225, 2
          %s229 = sadd.s32 %s227, %s228
          %s230 = smul.addr %s223, 4
          %s231 = sadd.s32 %s229, %s230
          %s232 = smul.addr %s231, 8
          %s233 = scalar_lea.vmem %s0, %s232
          %s234 = smul.u32 2, %s23
        $region20: #{tpu_custom_call.1} parent=15 // pred_fallthru
          _
        // Predicated region
        $region21: #{tpu_custom_call.1} parent=15 // pred_check
          %p235 = pneg %p85
        $region22: #{tpu_custom_call.1} parent=15 // pred_check_branch
          %237 = sbr.rel (%p235) target = $region24
        $region23: #{tpu_custom_call.1} parent=15 // pred_region
          %s238 = smul.u32 2, %s23
          %p239 = scmp.lt.s32.totalorder %s22, 1
          %s240 = scalar_select %p239, %s22, 1
          %p241 = scmp.lt.s32.totalorder %s238, 1
          %s242 = scalar_select %p241, %s238, 1
          %s243 = smul.addr %s240, 32
          %s244 = sadd.s32 %s242, %s243
          %s245 = smul.addr %s244, 4
          %s246 = scalar_lea.vmem %s1, %s245
          %s247 = smul.u32 2, %s23
        $region24: #{tpu_custom_call.1} parent=15 // pred_fallthru
          _
        // Predicated region
        $region25: #{tpu_custom_call.1} parent=15 // pred_check
          %p248 = pneg %p111
        $region26: #{tpu_custom_call.1} parent=15 // pred_check_branch
          %250 = sbr.rel (%p248) target = $region28
        $region27: #{tpu_custom_call.1} parent=15 // pred_region
          %p251 = scmp.lt.s32.totalorder %s22, 1
          %s252 = scalar_select %p251, %s22, 1
          %s253 = scalar_lea.vmem %s2, %s252
        $region28: #{tpu_custom_call.1} parent=15 // pred_fallthru
          _
        // Predicated region
        $region29: #{tpu_custom_call.1} parent=15 // pred_check
          %p254 = pneg %p139
        $region30: #{tpu_custom_call.1} parent=15 // pred_check_branch
          %256 = sbr.rel (%p254) target = $region32
        $region31: #{tpu_custom_call.1} parent=15 // pred_region
          %p257 = scmp.lt.s32.totalorder %s21, 1
          %s258 = scalar_select %p257, %s21, 1
          %p259 = scmp.lt.s32.totalorder %s22, 1
          %s260 = scalar_select %p259, %s22, 1
          %s261 = smul.addr %s258, 2
          %s262 = sadd.s32 %s260, %s261
          %s263 = smul.addr %s262, 8
          %s264 = scalar_lea.vmem %s3, %s263
        $region32: #{tpu_custom_call.1} parent=15 // pred_fallthru
          _
        // Predicated region
        $region33: #{tpu_custom_call.1} parent=15 // pred_check
          %p265 = pneg %p165
        $region34: #{tpu_custom_call.1} parent=15 // pred_check_branch
          %267 = sbr.rel (%p265) target = $region36
        $region35: #{tpu_custom_call.1} parent=15 // pred_region
          %p268 = scmp.lt.s32.totalorder %s22, 1
          %s269 = scalar_select %p268, %s22, 1
          %s270 = smul.addr %s269, 16
          %s271 = smul.addr %s270, 8
          %s272 = scalar_lea.vmem %s4, %s271
        $region36: #{tpu_custom_call.1} parent=15 // pred_fallthru
          _
      $region16: #{tpu_custom_call.1} parent=5 // pred_fallthru
        _
      %p273 = scmp.le.s32.totalorder 1, %s14
      %p274 = scmp.lt.s32.totalorder %s14, 5
      %p275 = pnand %p273, %p274
      %p276 = pneg %p275
      // Predicated region
      $region37: #{tpu_custom_call.1} parent=5 // pred_check
        _
      $region38: #{tpu_custom_call.1} parent=5 // pred_check_branch
        %278 = sbr.rel (%p275) target = $region40
      $region39: #{tpu_custom_call.1} parent=5 // pred_region
        %s279 = ssub.s32 %s14, 1
        %s280 = smul.u32 2, %s26
        %p281 = scmp.lt.s32.totalorder %s24, 1
        %s282 = scalar_select %p281, %s24, 1
        %p283 = scmp.lt.s32.totalorder %s25, 1
        %s284 = scalar_select %p283, %s25, 1
        %p285 = scmp.lt.s32.totalorder %s280, 1
        %s286 = scalar_select %p285, %s280, 1
        %s287 = smul.addr %s284, 2
        %s288 = sadd.s32 %s286, %s287
        %s289 = smul.addr %s282, 4
        %s290 = sadd.s32 %s288, %s289
        %s291 = smul.addr %s290, 8
        %s292 = scalar_lea.vmem %s0, %s291
        %p293 = pneg %p63
        %p294 = pneg %p60
        %s295 = smul.u32 2, %s26
        %p296 = scmp.lt.s32.totalorder %s25, 1
        %s297 = scalar_select %p296, %s25, 1
        %p298 = scmp.lt.s32.totalorder %s295, 1
        %s299 = scalar_select %p298, %s295, 1
        %s300 = smul.addr %s297, 32
        %s301 = sadd.s32 %s299, %s300
        %s302 = smul.addr %s301, 4
        %s303 = scalar_lea.vmem %s1, %s302
        %p304 = pneg %p91
        %p305 = pneg %p88
        %p306 = scmp.lt.s32.totalorder %s25, 1
        %s307 = scalar_select %p306, %s25, 1
        %s308 = scalar_lea.vmem %s2, %s307
        %p309 = pneg %p117
        %p310 = pneg %p114
        %p311 = scmp.lt.s32.totalorder %s24, 1
        %s312 = scalar_select %p311, %s24, 1
        %p313 = scmp.lt.s32.totalorder %s25, 1
        %s314 = scalar_select %p313, %s25, 1
        %s315 = smul.addr %s312, 2
        %s316 = sadd.s32 %s314, %s315
        %s317 = smul.addr %s316, 8
        %s318 = scalar_lea.vmem %s3, %s317
        %p319 = pneg %p145
        %p320 = pneg %p142
        %p321 = scmp.lt.s32.totalorder %s25, 1
        %s322 = scalar_select %p321, %s25, 1
        %s323 = smul.addr %s322, 16
        %s324 = smul.addr %s323, 8
        %s325 = scalar_lea.vmem %s4, %s324
        %p326 = pneg %p171
        %p327 = pneg %p168
        %p328 = pneg %p199
        %p329 = pneg %p196
        %s330 = sand.u32 %s186, 1
        %s331 = scalar_lea.sflag [#allocation7], %s330
        %s332 = sand.u32 %s186, 1
        %s333 = smul.addr %s332, 8
        %s334 = scalar_lea.vmem [#allocation6], %s333
        %s335 = smul.u32 2, %s26
        %p336 = scmp.lt.s32.totalorder %s24, 1
        %s337 = scalar_select %p336, %s24, 1
        %p338 = scmp.lt.s32.totalorder %s25, 1
        %s339 = scalar_select %p338, %s25, 1
        %p340 = scmp.lt.s32.totalorder %s335, 1
        %s341 = scalar_select %p340, %s335, 1
        %s342 = smul.addr %s339, 2
        %s343 = sadd.s32 %s341, %s342
        %s344 = smul.addr %s337, 4
        %s345 = sadd.s32 %s343, %s344
        %s346 = smul.addr %s345, 8
        %s347 = scalar_lea.vmem %s0, %s346
        %s348 = smul.u32 2, %s26
        %s349 = smul.u32 2, %s26
        %p350 = scmp.lt.s32.totalorder %s25, 1
        %s351 = scalar_select %p350, %s25, 1
        %p352 = scmp.lt.s32.totalorder %s349, 1
        %s353 = scalar_select %p352, %s349, 1
        %s354 = smul.addr %s351, 32
        %s355 = sadd.s32 %s353, %s354
        %s356 = smul.addr %s355, 4
        %s357 = scalar_lea.vmem %s1, %s356
        %s358 = smul.u32 2, %s26
        %p359 = scmp.lt.s32.totalorder %s25, 1
        %s360 = scalar_select %p359, %s25, 1
        %s361 = scalar_lea.vmem %s2, %s360
        %p362 = scmp.lt.s32.totalorder %s24, 1
        %s363 = scalar_select %p362, %s24, 1
        %p364 = scmp.lt.s32.totalorder %s25, 1
        %s365 = scalar_select %p364, %s25, 1
        %s366 = smul.addr %s363, 2
        %s367 = sadd.s32 %s365, %s366
        %s368 = smul.addr %s367, 8
        %s369 = scalar_lea.vmem %s3, %s368
        %p370 = scmp.lt.s32.totalorder %s25, 1
        %s371 = scalar_select %p370, %s25, 1
        %s372 = smul.addr %s371, 16
        %s373 = smul.addr %s372, 8
        %s374 = scalar_lea.vmem %s4, %s373
        %p377 = scmp.eq.s32.totalorder %s26, 0
        // Predicated region
        $region41: #{tpu_custom_call.1} parent=39 // pred_check
          %p378 = pneg %p377
        $region42: #{tpu_custom_call.1} parent=39 // pred_check_branch
          %380 = sbr.rel (%p378) target = $region44
        $region43: #{tpu_custom_call.1} parent=39 // pred_region
          %381 = vst [vmem:[#allocation2] sm:$0xff] 0.0
          %382 = vst [vmem:[#allocation3] sm:$0xff] 0.0
          %vm383 = vcmask 7168
          %384 = vst.msk [vmem:[#allocation4] sm:$0xff] %vm383, 0.0
          %385 = vst.msk [vmem:[#allocation5] sm:$0xff] %vm383, 0.0
        $region44: #{tpu_custom_call.1} parent=39 // pred_fallthru
          _
        %v386 = vld [vmem:[%s347] sm:$0xff]
        %v387 = vld [vmem:[%s347 + $0x8] sm:$0xff]
        %v388 = vld [vmem:[%s357] sm:$0xff]
        %v389 = vld [vmem:[%s357 + $0x8] sm:$0xff]
        %v390 = vld [vmem:[%s357 + $0x10] sm:$0xff]
        %v391 = vld [vmem:[%s357 + $0x18] sm:$0xff]
        %v392 = vld [vmem:[%s357 + $0x20] sm:$0xff]
        %v393 = vld [vmem:[%s357 + $0x28] sm:$0xff]
        %v394 = vld [vmem:[%s357 + $0x30] sm:$0xff]
        %v395 = vld [vmem:[%s357 + $0x38] sm:$0xff]
        %v396 = vld [vmem:[%s357 + $0x40] sm:$0xff]
        %v397 = vld [vmem:[%s357 + $0x48] sm:$0xff]
        %v398 = vld [vmem:[%s357 + $0x50] sm:$0xff]
        %v399 = vld [vmem:[%s357 + $0x58] sm:$0xff]
        %v400 = vld [vmem:[%s357 + $0x60] sm:$0xff]
        %v401 = vld [vmem:[%s357 + $0x68] sm:$0xff]
        %v402 = vld [vmem:[%s357 + $0x70] sm:$0xff]
        %v403 = vld [vmem:[%s357 + $0x78] sm:$0xff]
        %v404 = vand.u32 2147483647, %v386
        %v405 = vand.u32 2147483647, %v387
        %v406 = vsub.f32 0.0, %v404
        %v407 = vsub.f32 0.0, %v405
        %v408 = vmul.f32 %v406, 1.442695
        %v409 = vpow.pop %v408
        %v410 = vmul.f32 %v407, 1.442695
        %v411 = vpow.pop %v410
        %v412 = vsub.f32 0.0, %v386
        %v413 = vsub.f32 0.0, %v387
        %v414 = vmax.f32 %v412, 0.0
        %v415 = vmax.f32 %v413, 0.0
        %v416 = vadd.f32 %v409, 1.0
        %v417 = vlog2.pop %v416
        %v418 = vmul.f32 %v417, 0.6931472
        %v419 = vmul.f32 -0.5, %v409
        %v420 = vadd.f32 %v419, 1.0
        %v421 = vmul.f32 %v420, %v409
        %v422 = vand.u32 2147483647, %v409
        %vm423 = vcmp.lt.f32.partialorder %v422, 0.0004427343
        %v424 = vsel %vm423, %v421, %v418
        %v425 = vadd.f32 %v411, 1.0
        %v426 = vlog2.pop %v425
        %v427 = vmul.f32 %v426, 0.6931472
        %v428 = vmul.f32 -0.5, %v411
        %v429 = vadd.f32 %v428, 1.0
        %v430 = vmul.f32 %v429, %v411
        %v431 = vand.u32 2147483647, %v411
        %vm432 = vcmp.lt.f32.partialorder %v431, 0.0004427343
        %v433 = vsel %vm432, %v430, %v427
        %v434 = vadd.f32 %v414, %v424
        %v435 = vadd.f32 %v415, %v433
        %v436 = vadd.f32 %v409, 1.0
        %v437 = vadd.f32 %v411, 1.0
        %v438 = vrcp.pop %v436
        %v439 = vrcp.pop %v437
        %vm440 = vcmp.ge.f32.partialorder %v386, 0.0
        %vm441 = vcmp.ge.f32.partialorder %v387, 0.0
        %v442 = vmul.f32 %v409, %v438
        %v443 = vmul.f32 %v411, %v439
        %v444 = vsel %vm440, %v438, %v442
        %v445 = vsel %vm441, %v439, %v443
        %v446 = vsub.bf16 1065369472, %v388
        %v447 = vsub.bf16 1065369472, %v389
        %v448 = vsub.bf16 1065369472, %v390
        %v449 = vsub.bf16 1065369472, %v391
        %v450 = vsub.bf16 1065369472, %v392
        %v451 = vsub.bf16 1065369472, %v393
        %v452 = vsub.bf16 1065369472, %v394
        %v453 = vsub.bf16 1065369472, %v395
        %v454 = vsub.bf16 1065369472, %v396
        %v455 = vsub.bf16 1065369472, %v397
        %v456 = vsub.bf16 1065369472, %v398
        %v457 = vsub.bf16 1065369472, %v399
        %v458 = vsub.bf16 1065369472, %v400
        %v459 = vsub.bf16 1065369472, %v401
        %v460 = vsub.bf16 1065369472, %v402
        %v461 = vsub.bf16 1065369472, %v403
        %v462 = vld [vmem:[#allocation2] sm:$0xff]
        %v463 = vpack.c.bf16 %v386, %v386
        %v464 = vpack.c.bf16 %v387, %v387
        %v481 = vunpack.c.l.b16 %v446
        %v482 = vunpack.c.h.b16 %v446
        %v483 = vunpack.c.l.b16 %v447
        %v484 = vunpack.c.h.b16 %v447
        %v485 = vunpack.c.l.b16 %v448
        %v486 = vunpack.c.h.b16 %v448
        %v487 = vunpack.c.l.b16 %v449
        %v488 = vunpack.c.h.b16 %v449
        %v489 = vunpack.c.l.b16 %v450
        %v490 = vunpack.c.h.b16 %v450
        %v491 = vunpack.c.l.b16 %v451
        %v492 = vunpack.c.h.b16 %v451
        %v493 = vunpack.c.l.b16 %v452
        %v494 = vunpack.c.h.b16 %v452
        %v495 = vunpack.c.l.b16 %v453
        %v496 = vunpack.c.h.b16 %v453
        %v497 = vunpack.c.l.b16 %v454
        %v498 = vunpack.c.h.b16 %v454
        %v499 = vunpack.c.l.b16 %v455
        %v500 = vunpack.c.h.b16 %v455
        %v501 = vunpack.c.l.b16 %v456
        %v502 = vunpack.c.h.b16 %v456
        %v503 = vunpack.c.l.b16 %v457
        %v504 = vunpack.c.h.b16 %v457
        %v505 = vunpack.c.l.b16 %v458
        %v506 = vunpack.c.h.b16 %v458
        %v507 = vunpack.c.l.b16 %v459
        %v508 = vunpack.c.h.b16 %v459
        %v509 = vunpack.c.l.b16 %v460
        %v510 = vunpack.c.h.b16 %v460
        %v511 = vunpack.c.l.b16 %v461
        %v512 = vunpack.c.h.b16 %v461
        %v513 = vpack.c.b16 %v483, %v481
        %v514 = vpack.c.b16 %v484, %v482
        %v515 = vpack.c.b16 %v487, %v485
        %v516 = vpack.c.b16 %v488, %v486
        %v517 = vpack.c.b16 %v491, %v489
        %v518 = vpack.c.b16 %v492, %v490
        %v519 = vpack.c.b16 %v495, %v493
        %v520 = vpack.c.b16 %v496, %v494
        %v521 = vpack.c.b16 %v499, %v497
        %v522 = vpack.c.b16 %v500, %v498
        %v523 = vpack.c.b16 %v503, %v501
        %v524 = vpack.c.b16 %v504, %v502
        %v525 = vpack.c.b16 %v507, %v505
        %v526 = vpack.c.b16 %v508, %v506
        %v527 = vpack.c.b16 %v511, %v509
        %v528 = vpack.c.b16 %v512, %v510
        %545 = vmatprep.subr.bf16.mxu0 %v514
        %546 = vmatpush1.bf16.xpose.msra.mxu0 %v513
        %547 = vmatprep.subr.bf16.mxu0 %v516
        %548 = vmatpush1.bf16.xpose.msra.mxu0 %v515
        %549 = vmatprep.subr.bf16.mxu0 %v518
        %550 = vmatpush1.bf16.xpose.msra.mxu0 %v517
        %551 = vmatprep.subr.bf16.mxu0 %v520
        %552 = vmatpush1.bf16.xpose.msra.mxu0 %v519
        %553 = vmatprep.subr.bf16.mxu0 %v522
        %554 = vmatpush1.bf16.xpose.msra.mxu0 %v521
        %555 = vmatprep.subr.bf16.mxu0 %v524
        %556 = vmatpush1.bf16.xpose.msra.mxu0 %v523
        %557 = vmatprep.subr.bf16.mxu0 %v526
        %558 = vmatpush1.bf16.xpose.msra.mxu0 %v525
        %559 = vmatprep.subr.bf16.mxu0 %v528
        %560 = vmatpush1.bf16.xpose.msra.mxu0 %v527
        %561 = vmatprep.subr.bf16.mxu0 0
        %562 = vmatpush1.bf16.xpose.msra.mxu0 0
        %563 = vmatprep.subr.bf16.mxu0 0
        %564 = vmatpush1.bf16.xpose.msra.mxu0 0
        %565 = vmatprep.subr.bf16.mxu0 0
        %566 = vmatpush1.bf16.xpose.msra.mxu0 0
        %567 = vmatprep.subr.bf16.mxu0 0
        %568 = vmatpush1.bf16.xpose.msra.mxu0 0
        %569 = vmatprep.subr.bf16.mxu0 0
        %570 = vmatpush1.bf16.xpose.msra.mxu0 0
        %571 = vmatprep.subr.bf16.mxu0 0
        %572 = vmatpush1.bf16.xpose.msra.mxu0 0
        %573 = vmatprep.subr.bf16.mxu0 0
        %574 = vmatpush1.bf16.xpose.msra.mxu0 0
        %575 = vmatprep.subr.bf16.mxu0 0
        %576 = vmatpush1.bf16.xpose.msra.mxu0 0
        %577 = vmatprep.mubr.bf16.mxu0 %v464
        %578 = vmatmul.mubr.bf16.gmra.mrb[0].mxu0 %v463
        %v579 = vpop.f32.mrb[0].mxu0
        %v580 = vadd.f32 0.0, %v579
        %v581 = vpop.f32.mrb[0].mxu0
        %v582 = vpop.f32.mrb[0].mxu0
        %v583 = vpop.f32.mrb[0].mxu0
        %584 = vdwg.mxu0
        %v585 = vadd.f32 %v462, %v580
        %586 = vst [vmem:[#allocation2] sm:$0xff] %v585
        %v587 = vld [vmem:[#allocation3] sm:$0xff]
        %v588 = vpack.c.bf16 %v444, %v444
        %v589 = vpack.c.bf16 %v445, %v445
        %v606 = vunpack.c.l.b16 %v388
        %v607 = vunpack.c.h.b16 %v388
        %v608 = vunpack.c.l.b16 %v389
        %v609 = vunpack.c.h.b16 %v389
        %v610 = vunpack.c.l.b16 %v390
        %v611 = vunpack.c.h.b16 %v390
        %v612 = vunpack.c.l.b16 %v391
        %v613 = vunpack.c.h.b16 %v391
        %v614 = vunpack.c.l.b16 %v392
        %v615 = vunpack.c.h.b16 %v392
        %v616 = vunpack.c.l.b16 %v393
        %v617 = vunpack.c.h.b16 %v393
        %v618 = vunpack.c.l.b16 %v394
        %v619 = vunpack.c.h.b16 %v394
        %v620 = vunpack.c.l.b16 %v395
        %v621 = vunpack.c.h.b16 %v395
        %v622 = vunpack.c.l.b16 %v396
        %v623 = vunpack.c.h.b16 %v396
        %v624 = vunpack.c.l.b16 %v397
        %v625 = vunpack.c.h.b16 %v397
        %v626 = vunpack.c.l.b16 %v398
        %v627 = vunpack.c.h.b16 %v398
        %v628 = vunpack.c.l.b16 %v399
        %v629 = vunpack.c.h.b16 %v399
        %v630 = vunpack.c.l.b16 %v400
        %v631 = vunpack.c.h.b16 %v400
        %v632 = vunpack.c.l.b16 %v401
        %v633 = vunpack.c.h.b16 %v401
        %v634 = vunpack.c.l.b16 %v402
        %v635 = vunpack.c.h.b16 %v402
        %v636 = vunpack.c.l.b16 %v403
        %v637 = vunpack.c.h.b16 %v403
        %v638 = vpack.c.b16 %v608, %v606
        %v639 = vpack.c.b16 %v609, %v607
        %v640 = vpack.c.b16 %v612, %v610
        %v641 = vpack.c.b16 %v613, %v611
        %v642 = vpack.c.b16 %v616, %v614
        %v643 = vpack.c.b16 %v617, %v615
        %v644 = vpack.c.b16 %v620, %v618
        %v645 = vpack.c.b16 %v621, %v619
        %v646 = vpack.c.b16 %v624, %v622
        %v647 = vpack.c.b16 %v625, %v623
        %v648 = vpack.c.b16 %v628, %v626
        %v649 = vpack.c.b16 %v629, %v627
        %v650 = vpack.c.b16 %v632, %v630
        %v651 = vpack.c.b16 %v633, %v631
        %v652 = vpack.c.b16 %v636, %v634
        %v653 = vpack.c.b16 %v637, %v635
        %670 = vmatprep.subr.bf16.mxu0 %v639
        %671 = vmatpush1.bf16.xpose.msra.mxu0 %v638
        %672 = vmatprep.subr.bf16.mxu0 %v641
        %673 = vmatpush1.bf16.xpose.msra.mxu0 %v640
        %674 = vmatprep.subr.bf16.mxu0 %v643
        %675 = vmatpush1.bf16.xpose.msra.mxu0 %v642
        %676 = vmatprep.subr.bf16.mxu0 %v645
        %677 = vmatpush1.bf16.xpose.msra.mxu0 %v644
        %678 = vmatprep.subr.bf16.mxu0 %v647
        %679 = vmatpush1.bf16.xpose.msra.mxu0 %v646
        %680 = vmatprep.subr.bf16.mxu0 %v649
        %681 = vmatpush1.bf16.xpose.msra.mxu0 %v648
        %682 = vmatprep.subr.bf16.mxu0 %v651
        %683 = vmatpush1.bf16.xpose.msra.mxu0 %v650
        %684 = vmatprep.subr.bf16.mxu0 %v653
        %685 = vmatpush1.bf16.xpose.msra.mxu0 %v652
        %686 = vmatprep.subr.bf16.mxu0 0
        %687 = vmatpush1.bf16.xpose.msra.mxu0 0
        %688 = vmatprep.subr.bf16.mxu0 0
        %689 = vmatpush1.bf16.xpose.msra.mxu0 0
        %690 = vmatprep.subr.bf16.mxu0 0
        %691 = vmatpush1.bf16.xpose.msra.mxu0 0
        %692 = vmatprep.subr.bf16.mxu0 0
        %693 = vmatpush1.bf16.xpose.msra.mxu0 0
        %694 = vmatprep.subr.bf16.mxu0 0
        %695 = vmatpush1.bf16.xpose.msra.mxu0 0
        %696 = vmatprep.subr.bf16.mxu0 0
        %697 = vmatpush1.bf16.xpose.msra.mxu0 0
        %698 = vmatprep.subr.bf16.mxu0 0
        %699 = vmatpush1.bf16.xpose.msra.mxu0 0
        %700 = vmatprep.subr.bf16.mxu0 0
        %701 = vmatpush1.bf16.xpose.msra.mxu0 0
        %702 = vmatprep.mubr.bf16.mxu0 %v589
        %703 = vmatmul.mubr.bf16.gmra.mrb[0].mxu0 %v588
        %v704 = vpop.f32.mrb[0].mxu0
        %v705 = vadd.f32 0.0, %v704
        %v706 = vpop.f32.mrb[0].mxu0
        %v707 = vpop.f32.mrb[0].mxu0
        %v708 = vpop.f32.mrb[0].mxu0
        %709 = vdwg.mxu0
        %v710 = vadd.f32 %v587, %v705
        %711 = vst [vmem:[#allocation3] sm:$0xff] %v710
        %v712 = vld [vmem:[#allocation4] sm:$0xff]
        %v713 = vadd.f32 %v434, %v435
        %714 = vadd.xlane.f32.xlu0 %v713
        %v715 = vpop.xlane.xlu0 %714
        %v716 = vadd.f32 %v712, %v715
        %vm717 = vcmask 7168
        %718 = vst.msk [vmem:[#allocation4] sm:$0xff] %vm717, %v716
        %v719 = vld [vmem:[#allocation5] sm:$0xff]
        %v720 = vadd.f32 %v444, %v445
        %721 = vadd.xlane.f32.xlu0 %v720
        %v722 = vpop.xlane.xlu0 %721
        %v723 = vadd.f32 %v719, %v722
        %724 = vst.msk [vmem:[#allocation5] sm:$0xff] %vm717, %v723
        // Predicated region
        $region45: #{tpu_custom_call.1} parent=39 // pred_check
          %p725 = pneg %p377
        $region46: #{tpu_custom_call.1} parent=39 // pred_check_branch
          %727 = sbr.rel (%p725) target = $region48
        $region47: #{tpu_custom_call.1} parent=39 // pred_region
          %v728 = vld [vmem:[#allocation4] sm:$0xff]
          %v729 = vld [vmem:[#allocation2] sm:$0xff]
          %731 = vset.pattern.permute.xlu0 0
          %732 = vperm.xlu0 %731, %v728
          %v733 = vpop.permute.xlu0 %732
          %v735 = vadd.f32 %v733, %v729
          %v736 = vmul.f32 %v735, 0.00390625
          %v737 = vld [vmem:[#allocation5] sm:$0xff]
          %v738 = vld [vmem:[%s361] sm:$0x1]
          %740 = vset.pattern.permute.xlu0 0
          %741 = vperm.xlu0 %740, %v737
          %v742 = vpop.permute.xlu0 %741
          %v745 = vlaneseq
          %v746 = vshrl.u32 %v745, 7
          %v747 = vsub.s32 0, %v746
          %v748 = vrot.slane %v738, %v747
          %v750 = vadd.f32 %v742, %v748
          %v751 = vld [vmem:[#allocation3] sm:$0xff]
          %v752 = vmul.f32 %v751, 2.0
          %v753 = vadd.f32 %v752, 1.0
          %v754 = vadd.f32 %v750, 1.0
          %v755 = vrcp.pop %v754
          %v756 = vmul.f32 %v753, %v755
          %v757 = vsub.f32 1.0, %v756
          %v758 = vld [vmem:[%s369] sm:$0xff]
          %vm759 = vcmask 39936
          %v760 = vsel %vm759, %v758, -inf
          %761 = vmax.xlane.f32.xlu0 %v760
          %v762 = vpop.xlane.xlu0 %761
          %v763 = vsub.f32 %v758, %v762
          %v764 = vmul.f32 %v763, 1.442695
          %v765 = vpow.pop %v764
          %v766 = vsel %vm759, %v765, 0.0
          %767 = vadd.xlane.f32.xlu0 %v766
          %v768 = vpop.xlane.xlu0 %767
          %v769 = vrcp.pop %v768
          %v770 = vmul.f32 %v765, %v769
          %v771 = vld [vmem:[%s374] sm:$0xff]
          %v772 = vld [vmem:[%s374 + $0x8] sm:$0xff]
          %v773 = vld [vmem:[%s374 + $0x10] sm:$0xff]
          %v774 = vld [vmem:[%s374 + $0x18] sm:$0xff]
          %v775 = vld [vmem:[%s374 + $0x20] sm:$0xff]
          %v776 = vld [vmem:[%s374 + $0x28] sm:$0xff]
          %v777 = vld [vmem:[%s374 + $0x30] sm:$0xff]
          %v778 = vld [vmem:[%s374 + $0x38] sm:$0xff]
          %v779 = vld [vmem:[%s374 + $0x40] sm:$0xff]
          %v780 = vld [vmem:[%s374 + $0x48] sm:$0xff]
          %v781 = vld [vmem:[%s374 + $0x50] sm:$0xff]
          %v782 = vld [vmem:[%s374 + $0x58] sm:$0xff]
          %v783 = vld [vmem:[%s374 + $0x60] sm:$0xff]
          %v784 = vld [vmem:[%s374 + $0x68] sm:$0xff]
          %v785 = vld [vmem:[%s374 + $0x70] sm:$0xff]
          %v786 = vld [vmem:[%s374 + $0x78] sm:$0xff]
          %v788 = vsel %vm759, %v770, 0
          %v791 = vsel %vm759, %v771, 0
          %v794 = vsel %vm759, %v772, 0
          %v797 = vsel %vm759, %v773, 0
          %v800 = vsel %vm759, %v774, 0
          %v803 = vsel %vm759, %v775, 0
          %v806 = vsel %vm759, %v776, 0
          %v809 = vsel %vm759, %v777, 0
          %v812 = vsel %vm759, %v778, 0
          %v815 = vsel %vm759, %v779, 0
          %v818 = vsel %vm759, %v780, 0
          %v821 = vsel %vm759, %v781, 0
          %v824 = vsel %vm759, %v782, 0
          %v827 = vsel %vm759, %v783, 0
          %v830 = vsel %vm759, %v784, 0
          %v833 = vsel %vm759, %v785, 0
          %v836 = vsel %vm759, %v786, 0
          %838 = vmatprep.subr.mxu0 0.0
          %839 = vmatpush1.xpose.msra.mxu0 %v791
          %840 = vmatprep.subr.mxu0 0.0
          %841 = vmatpush1.xpose.msra.mxu0 %v794
          %842 = vmatprep.subr.mxu0 0.0
          %843 = vmatpush1.xpose.msra.mxu0 %v797
          %844 = vmatprep.subr.mxu0 0.0
          %845 = vmatpush1.xpose.msra.mxu0 %v800
          %846 = vmatprep.subr.mxu0 0.0
          %847 = vmatpush1.xpose.msra.mxu0 %v803
          %848 = vmatprep.subr.mxu0 0.0
          %849 = vmatpush1.xpose.msra.mxu0 %v806
          %850 = vmatprep.subr.mxu0 0.0
          %851 = vmatpush1.xpose.msra.mxu0 %v809
          %852 = vmatprep.subr.mxu0 0.0
          %853 = vmatpush1.xpose.msra.mxu0 %v812
          %854 = vmatprep.subr.mxu0 0.0
          %855 = vmatpush1.xpose.msra.mxu0 %v815
          %856 = vmatprep.subr.mxu0 0.0
          %857 = vmatpush1.xpose.msra.mxu0 %v818
          %858 = vmatprep.subr.mxu0 0.0
          %859 = vmatpush1.xpose.msra.mxu0 %v821
          %860 = vmatprep.subr.mxu0 0.0
          %861 = vmatpush1.xpose.msra.mxu0 %v824
          %862 = vmatprep.subr.mxu0 0.0
          %863 = vmatpush1.xpose.msra.mxu0 %v827
          %864 = vmatprep.subr.mxu0 0.0
          %865 = vmatpush1.xpose.msra.mxu0 %v830
          %866 = vmatprep.subr.mxu0 0.0
          %867 = vmatpush1.xpose.msra.mxu0 %v833
          %868 = vmatprep.subr.mxu0 0.0
          %869 = vmatpush1.xpose.msra.mxu0 %v836
          %870 = vmatprep.subr.mxu0 0.0
          %871 = vmatpush1.xpose.msra.mxu0 0.0
          %872 = vmatprep.subr.mxu0 0.0
          %873 = vmatpush1.xpose.msra.mxu0 0.0
          %874 = vmatprep.subr.mxu0 0.0
          %875 = vmatpush1.xpose.msra.mxu0 0.0
          %876 = vmatprep.subr.mxu0 0.0
          %877 = vmatpush1.xpose.msra.mxu0 0.0
          %878 = vmatprep.subr.mxu0 0.0
          %879 = vmatpush1.xpose.msra.mxu0 0.0
          %880 = vmatprep.subr.mxu0 0.0
          %881 = vmatpush1.xpose.msra.mxu0 0.0
          %882 = vmatprep.subr.mxu0 0.0
          %883 = vmatpush1.xpose.msra.mxu0 0.0
          %884 = vmatprep.subr.mxu0 0.0
          %885 = vmatpush1.xpose.msra.mxu0 0.0
          %886 = vmatprep.subr.mxu0 0.0
          %887 = vmatpush1.xpose.msra.mxu0 0.0
          %888 = vmatprep.subr.mxu0 0.0
          %889 = vmatpush1.xpose.msra.mxu0 0.0
          %890 = vmatprep.subr.mxu0 0.0
          %891 = vmatpush1.xpose.msra.mxu0 0.0
          %892 = vmatprep.subr.mxu0 0.0
          %893 = vmatpush1.xpose.msra.mxu0 0.0
          %894 = vmatprep.subr.mxu0 0.0
          %895 = vmatpush1.xpose.msra.mxu0 0.0
          %896 = vmatprep.subr.mxu0 0.0
          %897 = vmatpush1.xpose.msra.mxu0 0.0
          %898 = vmatprep.subr.mxu0 0.0
          %899 = vmatpush1.xpose.msra.mxu0 0.0
          %900 = vmatprep.subr.mxu0 0.0
          %901 = vmatpush1.xpose.msra.mxu0 0.0
          %902 = vmatprep.mubr.f32.mxu0 0.0
          %903 = vmatmul.mubr.f32.gmra.mrb[0].mxu0 %v788
          %v904 = vpop.f32.mrb[0].mxu0
          %v905 = vadd.f32 0.0, %v904
          %v906 = vpop.f32.mrb[0].mxu0
          %907 = vdwg.mxu0
          %v908 = vsub.f32 0.0, %v905
          %v909 = vmul.f32 %v736, 5.0
          %v910 = vmul.f32 %v908, 2.0
          %v911 = vadd.f32 %v909, %v910
          %v912 = vmul.f32 %v757, 5.0
          %v913 = vadd.f32 %v911, %v912
          %v914 = vmax.f32 %v913, -1e+10
          %v915 = vmin.f32 %v914, 1e+10
          %vm916 = vcmp.ne.f32.partialorder %v915, %v915
          %v917 = vsel %vm916, 0.0, %v915
          %918 = vst [vmem:[%s334] sm:$0xff] %v917
        $region48: #{tpu_custom_call.1} parent=39 // pred_fallthru
          _
        %s919 = sand.u32 %s186, 1
        %s920 = scalar_lea.sflag [#allocation7], %s919
        %s921 = sand.u32 %s186, 1
        %s922 = smul.addr %s921, 8
        %s923 = scalar_lea.vmem [#allocation6], %s922
        // Predicated region
        $region49: #{tpu_custom_call.1} parent=39 // pred_check
          %p924 = pneg %p196
        $region50: #{tpu_custom_call.1} parent=39 // pred_check_branch
          %926 = sbr.rel (%p924) target = $region52
        $region51: #{tpu_custom_call.1} parent=39 // pred_region
          %s928 = ssub.s32 128, 128
          %929 = vsyncadd %s920, %s928
          %s930 = smul.addr %s24, 2
          %s931 = sadd.s32 %s25, %s930
          %s932 = smul.addr %s931, 128
          %s933 = scalar_lea.hbm %s5, %s932
          %s935 = sshll.u32 %s923, 4
          %s936 = int_to_ptr.vmem [resolvable:$true] %s935
          %938 = dma.vmem_to_hbm [thread:$0]  %s936, 128, %s933, %s920
        $region52: #{tpu_custom_call.1} parent=39 // pred_fallthru
          _
      $region40: #{tpu_custom_call.1} parent=5 // pred_fallthru
        _
      %p939 = scmp.le.s32.totalorder 2, %s14
      // Predicated region
      $region53: #{tpu_custom_call.1} parent=5 // pred_check
        %p940 = pneg %p939
      $region54: #{tpu_custom_call.1} parent=5 // pred_check_branch
        %942 = sbr.rel (%p940) target = $region56
      $region55: #{tpu_custom_call.1} parent=5 // pred_region
        %s943 = ssub.s32 %s14, 2
        // Predicated region
        $region57: #{tpu_custom_call.1} parent=55 // pred_check
          %p944 = pneg %p202
        $region58: #{tpu_custom_call.1} parent=55 // pred_check_branch
          %946 = sbr.rel (%p944) target = $region60
        $region59: #{tpu_custom_call.1} parent=55 // pred_region
          %s947 = sand.u32 %s187, 1
          %s948 = scalar_lea.sflag [#allocation7], %s947
          %s949 = sand.u32 %s187, 1
          %s950 = smul.addr %s949, 8
          %s951 = scalar_lea.vmem [#allocation6], %s950
          %952 = dma.done %s948, 128
        $region60: #{tpu_custom_call.1} parent=55 // pred_fallthru
          _
      $region56: #{tpu_custom_call.1} parent=5 // pred_fallthru
        _
    $region6: #{tpu_custom_call.1} parent=1 // loop_footer
      %s18 = sadd.s32 1, %s14
    $region7: #{tpu_custom_call.1} parent=1 // loop_footer_branch
      %13 = sbr.rel target = $region3
    $region8: #{tpu_custom_call.1} parent=1 // loop_exit
      _
    %953 = vsyncpa [#allocation7], 1
    %s954 = scalar_lea.sflag [#allocation7], 1
    %955 = vsyncpa %s954, 1

</llo_original>
